<compile_context>
chip_gen: v5e
topology: v5e:2x2
jax: 0.10.0
libtpu: 0.0.40
codegen_flags: <defaults>
</compile_context>

<pallas_src>
import math

import jax
import jax.numpy as jnp
from jax import lax
from jax.experimental import pallas as pl
from jax.experimental.pallas import tpu as pltpu

GN_EPS = 1e-5
NUM_GROUPS = 32


# --------------------------------------------------------------------------- #
# Kernel 1: GroupNorm apply (precomputed scale/shift) + fused qkv projection.  #
# --------------------------------------------------------------------------- #
def _qkv_kernel(x_ref, scale_ref, shift_ref, wqkv_ref, bqkv_ref,
                q_ref, k_ref, v_ref):
    x = x_ref[0]                                    # (tr, C) fp32
    C = x.shape[1]
    # GroupNorm as a per-(batch, channel) affine: h = x * scale + shift
    h = x * scale_ref[0] + shift_ref[0]             # (tr, C) fp32
    # Fused q/k/v projection, bf16 operands, fp32 accumulation on the MXU.
    qkv = jnp.dot(h.astype(jnp.bfloat16), wqkv_ref[...],
                  preferred_element_type=jnp.float32) + bqkv_ref[...]   # (tr, 3C)
    q_ref[0] = qkv[:, :C].astype(jnp.bfloat16)      # 1/sqrt(C) already folded into Wq
    k_ref[0] = qkv[:, C:2 * C].astype(jnp.bfloat16)
    v_ref[0] = qkv[:, 2 * C:].astype(jnp.bfloat16)


# --------------------------------------------------------------------------- #
# Kernel 2: flash attention + output projection + residual.                    #
# --------------------------------------------------------------------------- #
def _flash_attn_kernel(x_ref, q_ref, k_ref, v_ref, wp_ref, bp_ref,
                       o_ref, m_sc, l_sc, acc_sc):
    kv = pl.program_id(2)

    @pl.when(kv == 0)
    def _():
        m_sc[...] = jnp.full(m_sc.shape, -jnp.inf, dtype=m_sc.dtype)
        l_sc[...] = jnp.zeros(l_sc.shape, dtype=l_sc.dtype)
        acc_sc[...] = jnp.zeros(acc_sc.shape, dtype=acc_sc.dtype)

    q = q_ref[0]                                    # (tq, C) bf16, scale folded in
    k = k_ref[0]                                    # (tk, C) bf16
    # s = q @ k^T, fp32 accumulation
    s = lax.dot_general(q, k, (((1,), (1,)), ((), ())),
                        preferred_element_type=jnp.float32)            # (tq, tk)

    m_prev = m_sc[...]
    m_new = jnp.maximum(m_prev, jnp.max(s, axis=-1, keepdims=True))
    alpha = jnp.exp(m_prev - m_new)                 # (tq, 1)
    p = jnp.exp(s - m_new)                          # (tq, tk) fp32
    l_sc[...] = alpha * l_sc[...] + jnp.sum(p, axis=-1, keepdims=True)
    acc_sc[...] = alpha * acc_sc[...] + jnp.dot(p.astype(jnp.bfloat16), v_ref[0],
                                                preferred_element_type=jnp.float32)
    m_sc[...] = m_new

    @pl.when(kv == pl.num_programs(2) - 1)
    def _():
        attn = acc_sc[...] * pl.reciprocal(l_sc[...], approx=True)      # (tq, C)
        proj = jnp.dot(attn.astype(jnp.bfloat16), wp_ref[...],
                       preferred_element_type=jnp.float32) + bp_ref[...]
        o_ref[0] = x_ref[0] + proj                  # residual in fp32


# --------------------------------------------------------------------------- #
# Wrapper                                                                      #
# --------------------------------------------------------------------------- #
def _pick_tile(n, target):
    """Largest multiple-of-8 divisor of n that is <= target; else full n."""
    if n <= target:
        return n
    for t in range(min(target, n), 7, -1):
        if n % t == 0 and t % 8 == 0:
            return t
    return n


def _vmem_limit_qkv(tr, C):
    f32, bf16 = 4, 2
    blocks = 2 * (tr * C * f32 + 2 * C * f32 + 3 * tr * C * bf16)   # dbl-buffered I/O
    weights = 2 * (C * 3 * C * bf16 + 3 * C * f32)
    interm = tr * 3 * C * f32
    return int(2 * (blocks + weights + interm)) + (16 << 20)


def _vmem_limit_flash(tq, tk, C):
    f32, bf16 = 4, 2
    blocks = 2 * (tq * C * f32 + tq * C * bf16 + 2 * tk * C * bf16 + tq * C * f32)
    weights = 2 * (C * C * bf16 + C * f32)
    scratch = tq * C * f32 + 2 * tq * f32
    return int(2 * (blocks + weights + scratch)) + (16 << 20)


def attn_block_pallas(x_nchw, params, *, tq=None, tk=None):
    B, C, H, W = x_nchw.shape
    N = H * W
    assert C % NUM_GROUPS == 0

    # TODO(synk): NCHW<->NHWC layout changes are separate XLA HBM round-trips; in a real
    # model keep the activations channels-last and fuse this into producer/consumer.
    x = jnp.transpose(x_nchw, (0, 2, 3, 1)).reshape(B, N, C).astype(jnp.float32)

    # ---- GroupNorm statistics (full-N reduction) done once in XLA, two-pass var ----
    G = NUM_GROUPS
    xg = x.reshape(B, N, G, C // G)
    mean = jnp.mean(xg, axis=(1, 3))                                    # (B, G)
    var = jnp.mean(jnp.square(xg - mean[:, None, :, None]), axis=(1, 3))
    inv_std = lax.rsqrt(var + GN_EPS)                                   # (B, G)
    mean_c = jnp.repeat(mean, C // G, axis=1)                           # (B, C)
    inv_c = jnp.repeat(inv_std, C // G, axis=1)                         # (B, C)
    gamma = params["gamma"].reshape(1, C).astype(jnp.float32)
    beta = params["beta"].reshape(1, C).astype(jnp.float32)
    gn_scale = (inv_c * gamma).reshape(B, 1, C).astype(jnp.float32)
    gn_shift = (beta - mean_c * inv_c * gamma).reshape(B, 1, C).astype(jnp.float32)

    # ---- fused qkv weights; fold attention 1/sqrt(C) into Wq/bq; bf16 weights ----
    attn_scale = jnp.float32(int(C) ** (-0.5))
    w_qkv = jnp.concatenate(
        [params["wq"] * attn_scale, params["wk"], params["wv"]], axis=1
    ).astype(jnp.bfloat16)                                              # (C, 3C)
    b_qkv = jnp.concatenate(
        [params["bq"] * attn_scale, params["bk"], params["bv"]], axis=0
    ).reshape(1, 3 * C).astype(jnp.float32)
    wp = params["wp"].astype(jnp.bfloat16)                              # (C, C)
    bp = params["bp"].reshape(1, C).astype(jnp.float32)

    # ---- tile sizes (sized for v7x's 64 MiB VMEM; divisors of N, multiples of 8) ----
    if tq is None:
        tq = _pick_tile(N, 256)
    if tk is None:
        tk = _pick_tile(N, 512)
    tr = _pick_tile(N, 512)

    # ---- kernel 1: GroupNorm-apply + qkv projection ----
    q, k, v = pl.pallas_call(
        _qkv_kernel,
        out_shape=[jax.ShapeDtypeStruct((B, N, C), jnp.bfloat16)] * 3,
        grid=(B, N // tr),
        in_specs=[
            pl.BlockSpec((1, tr, C), lambda b, i: (b, i, 0)),     # x
            pl.BlockSpec((1, 1, C), lambda b, i: (b, 0, 0)),      # gn_scale
            pl.BlockSpec((1, 1, C), lambda b, i: (b, 0, 0)),      # gn_shift
            pl.BlockSpec((C, 3 * C), lambda b, i: (0, 0)),        # w_qkv
            pl.BlockSpec((1, 3 * C), lambda b, i: (0, 0)),        # b_qkv
        ],
        out_specs=[pl.BlockSpec((1, tr, C), lambda b, i: (b, i, 0))] * 3,
        compiler_params=pltpu.CompilerParams(
            dimension_semantics=("parallel", "parallel"),
            vmem_limit_bytes=_vmem_limit_qkv(tr, C)),
    )(x, gn_scale, gn_shift, w_qkv, b_qkv)

    # ---- kernel 2: flash attention + output projection + residual ----
    out = pl.pallas_call(
        _flash_attn_kernel,
        out_shape=jax.ShapeDtypeStruct((B, N, C), jnp.float32),
        grid=(B, N // tq, N // tk),
        in_specs=[
            pl.BlockSpec((1, tq, C), lambda b, i, j: (b, i, 0)),  # x (residual)
            pl.BlockSpec((1, tq, C), lambda b, i, j: (b, i, 0)),  # q
            pl.BlockSpec((1, tk, C), lambda b, i, j: (b, j, 0)),  # k
            pl.BlockSpec((1, tk, C), lambda b, i, j: (b, j, 0)),  # v
            pl.BlockSpec((C, C), lambda b, i, j: (0, 0)),         # wp
            pl.BlockSpec((1, C), lambda b, i, j: (0, 0)),         # bp
        ],
        out_specs=pl.BlockSpec((1, tq, C), lambda b, i, j: (b, i, 0)),
        scratch_shapes=[
            pltpu.VMEM((tq, 1), jnp.float32),   # running max m
            pltpu.VMEM((tq, 1), jnp.float32),   # running sum l
            pltpu.VMEM((tq, C), jnp.float32),   # accumulator
        ],
        compiler_params=pltpu.CompilerParams(
            dimension_semantics=("parallel", "parallel", "arbitrary"),
            vmem_limit_bytes=_vmem_limit_flash(tq, tk, C)),
    )(x, q, k, v, wp, bp)

    return out.reshape(B, H, W, C).transpose(0, 3, 1, 2)


# --------------------------------------------------------------------------- #
# Parameters (matching the PyTorch module's initialize()) and fp32 reference.  #
# --------------------------------------------------------------------------- #
def make_params(key, C, proj_gain=1e-5):
    assert C % NUM_GROUPS == 0
    ks = jax.random.split(key, 4)

    def xavier_conv1x1(k, gain=1.0):
        # torch xavier_uniform_ on (C_out, C_in, 1, 1): fan_in = fan_out = C
        bound = gain * math.sqrt(6.0 / (C + C))
        w = jax.random.uniform(k, (C, C), jnp.float32, minval=-bound, maxval=bound)
        return w.T  # stored as (C_in, C_out) so the kernel computes h @ W

    zeros = jnp.zeros((C,), jnp.float32)
    return dict(
        gamma=jnp.ones((C,), jnp.float32), beta=zeros,
        wq=xavier_conv1x1(ks[0]), bq=zeros,
        wk=xavier_conv1x1(ks[1]), bk=zeros,
        wv=xavier_conv1x1(ks[2]), bv=zeros,
        wp=xavier_conv1x1(ks[3], gain=proj_gain), bp=zeros,
    )


def attn_block_reference(x_nchw, params):
    """Pure-JAX fp32 reference of the PyTorch forward."""
    B, C, H, W = x_nchw.shape
    N = H * W
    x = jnp.transpose(x_nchw, (0, 2, 3, 1)).reshape(B, N, C)
    G = NUM_GROUPS
    xg = x.reshape(B, N, G, C // G)
    mean = jnp.mean(xg, axis=(1, 3), keepdims=True)
    var = jnp.mean((xg - mean) ** 2, axis=(1, 3), keepdims=True)
    h = ((xg - mean) / jnp.sqrt(var + GN_EPS)).reshape(B, N, C) * params["gamma"] + params["beta"]
    q = h @ params["wq"] + params["bq"]
    k = h @ params["wk"] + params["bk"]
    v = h @ params["wv"] + params["bv"]
    w = jnp.einsum("bnc,bmc->bnm", q, k) * (int(C) ** (-0.5))
    w = jax.nn.softmax(w, axis=-1)
    ho = jnp.einsum("bnm,bmc->bnc", w, v) @ params["wp"] + params["bp"]
    out = x + ho
    return out.reshape(B, H, W, C).transpose(0, 3, 1, 2)


if __name__ == "__main__":
    key = jax.random.PRNGKey(0)
    k_x, k_p = jax.random.split(key)

    # Small but lane-dense: C multiple of 128 (and of 32 for GroupNorm), N = 256.
    B, C, H, W = 2, 128, 16, 16
    x = jax.random.normal(k_x, (B, C, H, W), jnp.float32)

    # Faithful init (proj gain 1e-5, as in the module's initialize()).
    params = make_params(k_p, C)
    out = jax.block_until_ready(attn_block_pallas(x, params, tq=128, tk=128))
    ref = attn_block_reference(x, params)
    assert out.shape == (B, C, H, W)
    err = float(jnp.max(jnp.abs(out - ref)))
    assert err < 1e-3, f"faithful-init max err {err}"

    # Stress the attention path with O(1) output-projection weights; tolerance covers
    # bf16 MXU operands + approx reciprocal (real bugs would give O(1) errors).
    params2 = make_params(k_p, C, proj_gain=1.0)
    out2 = jax.block_until_ready(attn_block_pallas(x, params2, tq=128, tk=128))
    ref2 = attn_block_reference(x, params2)
    err2 = float(jnp.max(jnp.abs(out2 - ref2)))
    assert err2 < 1e-1, f"gain-1.0 max err {err2}"

    print("KERNEL_OK")
</pallas_src>

<mosaic_0001>
module attributes {stable_mosaic.version = 11 : i64} {
  func.func @_qkv_kernel(%arg0: i32, %arg1: i32, %arg2: memref<1x256x128xf32, #tpu.memory_space<vmem>>, %arg3: memref<1x1x128xf32, #tpu.memory_space<vmem>>, %arg4: memref<1x1x128xf32, #tpu.memory_space<vmem>>, %arg5: memref<128x384xbf16, #tpu.memory_space<vmem>>, %arg6: memref<1x384xf32, #tpu.memory_space<vmem>>, %arg7: memref<1x256x128xbf16, #tpu.memory_space<vmem>>, %arg8: memref<1x256x128xbf16, #tpu.memory_space<vmem>>, %arg9: memref<1x256x128xbf16, #tpu.memory_space<vmem>>) attributes {dimension_semantics = [#tpu.dimension_semantics<parallel>, #tpu.dimension_semantics<parallel>], iteration_bounds = array<i64: 2, 1>, scalar_prefetch = 0 : i64, scratch_operands = 0 : i64, tpu.core_type = #tpu.core_type<tc>, window_params = [{transform_indices = @transform_0, window_bounds = array<i64: 1, 256, 128>}, {transform_indices = @transform_1, window_bounds = array<i64: 1, 1, 128>}, {transform_indices = @transform_2, window_bounds = array<i64: 1, 1, 128>}, {pipeline_mode = #tpu.pipeline_mode<synchronous>, transform_indices = @transform_3, window_bounds = array<i64: 128, 384>}, {pipeline_mode = #tpu.pipeline_mode<synchronous>, transform_indices = @transform_4, window_bounds = array<i64: 1, 384>}, {transform_indices = @transform_5, window_bounds = array<i64: 1, 256, 128>}, {transform_indices = @transform_6, window_bounds = array<i64: 1, 256, 128>}, {transform_indices = @transform_7, window_bounds = array<i64: 1, 256, 128>}]} {
    %c0 = arith.constant 0 : index
    %c0_0 = arith.constant 0 : index
    %c0_1 = arith.constant 0 : index
    %0 = vector.load %arg2[%c0, %c0_0, %c0_1] : memref<1x256x128xf32, #tpu.memory_space<vmem>>, vector<1x256x128xf32>
    %1 = vector.shape_cast %0 : vector<1x256x128xf32> to vector<256x128xf32>
    %c0_2 = arith.constant 0 : index
    %c0_3 = arith.constant 0 : index
    %c0_4 = arith.constant 0 : index
    %2 = vector.load %arg3[%c0_2, %c0_3, %c0_4] : memref<1x1x128xf32, #tpu.memory_space<vmem>>, vector<1x1x128xf32>
    %3 = vector.shape_cast %2 : vector<1x1x128xf32> to vector<1x128xf32>
    %4 = vector.broadcast %3 : vector<1x128xf32> to vector<256x128xf32>
    %5 = arith.mulf %1, %4 : vector<256x128xf32>
    %c0_5 = arith.constant 0 : index
    %c0_6 = arith.constant 0 : index
    %c0_7 = arith.constant 0 : index
    %6 = vector.load %arg4[%c0_5, %c0_6, %c0_7] : memref<1x1x128xf32, #tpu.memory_space<vmem>>, vector<1x1x128xf32>
    %7 = vector.shape_cast %6 : vector<1x1x128xf32> to vector<1x128xf32>
    %8 = vector.broadcast %7 : vector<1x128xf32> to vector<256x128xf32>
    %9 = arith.addf %5, %8 : vector<256x128xf32>
    %10 = arith.truncf %9 : vector<256x128xf32> to vector<256x128xbf16>
    %c0_8 = arith.constant 0 : index
    %c0_9 = arith.constant 0 : index
    %11 = vector.load %arg5[%c0_8, %c0_9] : memref<128x384xbf16, #tpu.memory_space<vmem>>, vector<128x384xbf16>
    %cst = arith.constant dense<0.000000e+00> : vector<256x384xf32>
    %12 = tpu.matmul %10, %11, %cst {dimension_numbers = #tpu.dot_dimension_numbers<[1], [0], [0], [1], [0, 0, 1, 1], [], []>} : vector<256x128xbf16>, vector<128x384xbf16>, vector<256x384xf32> -> vector<256x384xf32>
    %c0_10 = arith.constant 0 : index
    %c0_11 = arith.constant 0 : index
    %13 = vector.load %arg6[%c0_10, %c0_11] : memref<1x384xf32, #tpu.memory_space<vmem>>, vector<1x384xf32>
    %14 = vector.broadcast %13 : vector<1x384xf32> to vector<256x384xf32>
    %15 = arith.addf %12, %14 : vector<256x384xf32>
    %16 = vector.extract_strided_slice %15 {offsets = [0, 0], sizes = [256, 128], strides = [1, 1]} : vector<256x384xf32> to vector<256x128xf32>
    %17 = arith.truncf %16 : vector<256x128xf32> to vector<256x128xbf16>
    %c0_12 = arith.constant 0 : index
    %c0_13 = arith.constant 0 : index
    %c0_14 = arith.constant 0 : index
    %18 = vector.load %arg7[%c0_12, %c0_13, %c0_14] : memref<1x256x128xbf16, #tpu.memory_space<vmem>>, vector<1x256x128xbf16>
    %19 = vector.shape_cast %18 : vector<1x256x128xbf16> to vector<256x128xbf16>
    %20 = vector.shape_cast %17 : vector<256x128xbf16> to vector<1x256x128xbf16>
    tpu.vector_store %arg7[%c0_12, %c0_13, %c0_14], %20 {strides = array<i32>} : memref<1x256x128xbf16, #tpu.memory_space<vmem>>, vector<1x256x128xbf16>,
    %21 = vector.extract_strided_slice %15 {offsets = [0, 128], sizes = [256, 128], strides = [1, 1]} : vector<256x384xf32> to vector<256x128xf32>
    %22 = arith.truncf %21 : vector<256x128xf32> to vector<256x128xbf16>
    %c0_15 = arith.constant 0 : index
    %c0_16 = arith.constant 0 : index
    %c0_17 = arith.constant 0 : index
    %23 = vector.load %arg8[%c0_15, %c0_16, %c0_17] : memref<1x256x128xbf16, #tpu.memory_space<vmem>>, vector<1x256x128xbf16>
    %24 = vector.shape_cast %23 : vector<1x256x128xbf16> to vector<256x128xbf16>
    %25 = vector.shape_cast %22 : vector<256x128xbf16> to vector<1x256x128xbf16>
    tpu.vector_store %arg8[%c0_15, %c0_16, %c0_17], %25 {strides = array<i32>} : memref<1x256x128xbf16, #tpu.memory_space<vmem>>, vector<1x256x128xbf16>,
    %26 = vector.extract_strided_slice %15 {offsets = [0, 256], sizes = [256, 128], strides = [1, 1]} : vector<256x384xf32> to vector<256x128xf32>
    %27 = arith.truncf %26 : vector<256x128xf32> to vector<256x128xbf16>
    %c0_18 = arith.constant 0 : index
    %c0_19 = arith.constant 0 : index
    %c0_20 = arith.constant 0 : index
    %28 = vector.load %arg9[%c0_18, %c0_19, %c0_20] : memref<1x256x128xbf16, #tpu.memory_space<vmem>>, vector<1x256x128xbf16>
    %29 = vector.shape_cast %28 : vector<1x256x128xbf16> to vector<256x128xbf16>
    %30 = vector.shape_cast %27 : vector<256x128xbf16> to vector<1x256x128xbf16>
    tpu.vector_store %arg9[%c0_18, %c0_19, %c0_20], %30 {strides = array<i32>} : memref<1x256x128xbf16, #tpu.memory_space<vmem>>, vector<1x256x128xbf16>,
    return
  }
  func.func @transform_0(%arg0: i32, %arg1: i32) -> (i32, i32, i32) {
    %c0_i32 = arith.constant 0 : i32
    %c0_i32_0 = arith.constant 0 : i32
    return %arg0, %arg1, %c0_i32 : i32, i32, i32
  }
  func.func @transform_1(%arg0: i32, %arg1: i32) -> (i32, i32, i32) {
    %c0_i32 = arith.constant 0 : i32
    %c0_i32_0 = arith.constant 0 : i32
    %c0_i32_1 = arith.constant 0 : i32
    return %arg0, %c0_i32, %c0_i32_0 : i32, i32, i32
  }
  func.func @transform_2(%arg0: i32, %arg1: i32) -> (i32, i32, i32) {
    %c0_i32 = arith.constant 0 : i32
    %c0_i32_0 = arith.constant 0 : i32
    %c0_i32_1 = arith.constant 0 : i32
    return %arg0, %c0_i32, %c0_i32_0 : i32, i32, i32
  }
  func.func @transform_3(%arg0: i32, %arg1: i32) -> (i32, i32) {
    %c0_i32 = arith.constant 0 : i32
    %c0_i32_0 = arith.constant 0 : i32
    %c0_i32_1 = arith.constant 0 : i32
    return %c0_i32, %c0_i32_0 : i32, i32
  }
  func.func @transform_4(%arg0: i32, %arg1: i32) -> (i32, i32) {
    %c0_i32 = arith.constant 0 : i32
    %c0_i32_0 = arith.constant 0 : i32
    %c0_i32_1 = arith.constant 0 : i32
    return %c0_i32, %c0_i32_0 : i32, i32
  }
  func.func @transform_5(%arg0: i32, %arg1: i32) -> (i32, i32, i32) {
    %c0_i32 = arith.constant 0 : i32
    %c0_i32_0 = arith.constant 0 : i32
    return %arg0, %arg1, %c0_i32 : i32, i32, i32
  }
  func.func @transform_6(%arg0: i32, %arg1: i32) -> (i32, i32, i32) {
    %c0_i32 = arith.constant 0 : i32
    %c0_i32_0 = arith.constant 0 : i32
    return %arg0, %arg1, %c0_i32 : i32, i32, i32
  }
  func.func @transform_7(%arg0: i32, %arg1: i32) -> (i32, i32, i32) {
    %c0_i32 = arith.constant 0 : i32
    %c0_i32_0 = arith.constant 0 : i32
    return %arg0, %arg1, %c0_i32 : i32, i32, i32
  }
}

</mosaic_0001>

<llo_original>
// kernel: tpu_custom_call.1
$region0: #{tpu_custom_call.1}
  #allocation0 [shape = 'u32[]', space=smem, size = 0x4, offset = 0x4, fixed_abs, tag = 'smem constant byte address 0x4 - core index']
  #allocation1 [shape = 'u32[72,128]{1,0:T(1,128)}', space=vmem, size = 0x9000, scoped, tag = 'internal scratch']
  %s0 = inlined_call_operand.hbm [shape: f32[2,256,128], index: 0, kind: input, shape index: {}]
  %s1 = inlined_call_operand.hbm [shape: f32[2,1,128], index: 1, kind: input, shape index: {}]
  %s2 = inlined_call_operand.hbm [shape: f32[2,1,128], index: 2, kind: input, shape index: {}]
  %s3 = inlined_call_operand.hbm [shape: bf16[128,384], index: 3, kind: input, shape index: {}]
  %s4 = inlined_call_operand.vmem [shape: f32[1,384], index: 4, kind: input, shape index: {}]
  %s5 = inlined_call_operand.hbm [shape: bf16[2,256,128], index: 5, kind: output, shape index: {0}]
  %s6 = inlined_call_operand.hbm [shape: bf16[2,256,128], index: 6, kind: output, shape index: {1}]
  %s7 = inlined_call_operand.hbm [shape: bf16[2,256,128], index: 7, kind: output, shape index: {2}]
  %8 = xla_tuple %s5, %s6, %s7
  %s9 = sld [smem:[#allocation0]]
  $region85: #{tpu_custom_call.1} parent=0
    _
  %s11 = ssub.s32 1, %s9
  %s12 = scalar_select 0, %s11, %s9
  $region1: #{tpu_custom_call.1} parent=0
    #allocation2 [shape = 'u8[262144]{0}', space=vmem, size = 0x40000, scoped, tag = 'input window, operand 0']
    #allocation3 [shape = 's32[2]{0}', space=sflag, size = 0x8, scoped, tag = 'scoped memory for tpu_custom_call.1']
    #allocation4 [shape = 's32[2]{0}', space=sflag, size = 0x8, scoped, tag = 'scoped memory for tpu_custom_call.1']
    #allocation5 [shape = 'u8[1024]{0}', space=vmem, size = 0x400, scoped, tag = 'input window, operand 1']
    #allocation6 [shape = 's32[2]{0}', space=sflag, size = 0x8, scoped, tag = 'scoped memory for tpu_custom_call.1']
    #allocation7 [shape = 'u8[1024]{0}', space=vmem, size = 0x400, scoped, tag = 'input window, operand 2']
    #allocation8 [shape = 'u8[98304]{0}', space=vmem, size = 0x18000, scoped, tag = 'input window, operand 3, single buffered']
    #allocation9 [shape = 's32[1]{0}', space=sflag, size = 0x4, scoped, tag = 'scoped memory for tpu_custom_call.1']
    #allocation10 [shape = 'u8[131072]{0}', space=vmem, size = 0x20000, scoped, tag = 'output window, operand 0']
    #allocation11 [shape = 'u8[131072]{0}', space=vmem, size = 0x20000, scoped, tag = 'output window, operand 1']
    #allocation12 [shape = 's32[2]{0}', space=sflag, size = 0x8, scoped, tag = 'scoped memory for tpu_custom_call.1']
    #allocation13 [shape = 'u8[131072]{0}', space=vmem, size = 0x20000, scoped, tag = 'output window, operand 2']
    %13 = vsyncpa [#allocation3], 0
    %s14 = scalar_lea.sflag [#allocation3], 1
    %15 = vsyncpa %s14, 0
    %16 = vsyncpa [#allocation6], 0
    %s17 = scalar_lea.sflag [#allocation6], 1
    %18 = vsyncpa %s17, 0
    %19 = vsyncpa [#allocation9], 0
    %20 = vsyncpa [#allocation4], 0
    %s21 = scalar_lea.sflag [#allocation4], 1
    %22 = vsyncpa %s21, 0
    %23 = vsyncpa [#allocation12], 0
    %s24 = scalar_lea.sflag [#allocation12], 1
    %25 = vsyncpa %s24, 0
    loop: start=0, step=1, limit=4
    $region2: #{tpu_custom_call.1} parent=1 // loop_pre_header
      _
    $region3: #{tpu_custom_call.1} parent=1 // loop_header
      %s27 = sphi 0, %s31
      %p28 = scmp.ge.s32.totalorder %s27, 4
      %s34 = sphi 0, %s46
      %s35 = sphi 0, %s42
      %s36 = sphi 0, %s34
      %s37 = sphi 0, %s35
      %s38 = sphi 0, %s36
      %s39 = sphi 0, %s37
      %s51 = sphi 0, %s53
      %s54 = sphi 0, %s51
      %s55 = sphi 0, %s54
      %s71 = sphi 0, %s55
      %s77 = sphi 0, %s79
      %s80 = sphi 0, %s77
      %s81 = sphi 0, %s80
      %s97 = sphi 0, %s81
      %s103 = sphi 0, %s105
      %s106 = sphi 0, %s103
      %s107 = sphi 0, %s106
      %s123 = sphi 0, %s107
      %s127 = sphi 0, %s127
      %s129 = sphi 0, %s127
      %s130 = sphi 0, %s129
      %s144 = sphi 0, %s130
      %s148 = sphi 0, %s148
      %s150 = sphi 0, %s148
      %s151 = sphi 0, %s150
      %s165 = sphi 0, %s151
      %s173 = sphi 0, %s175
      %s176 = sphi 0, %s173
      %s177 = sphi 0, %s176
      %s193 = sphi 0, %s177
      %s201 = sphi 0, %s203
      %s204 = sphi 0, %s201
      %s205 = sphi 0, %s204
      %s221 = sphi 0, %s205
      %s229 = sphi 0, %s231
      %s232 = sphi 0, %s229
      %s233 = sphi 0, %s232
      %s249 = sphi 0, %s233
    $region4: #{tpu_custom_call.1} parent=1 // loop_header_branch
      %30 = sbr.rel (%p28) target = $region8
    $region5: #{tpu_custom_call.1} parent=1 // loop_body
      %s32 = ssub.s32 %s27, 1
      %s33 = ssub.s32 %s27, 2
      %s40 = sadd.s32 1, %s35
      %p41 = scmp.ge.s32.totalorder %s40, 1
      %s42 = scalar_select %p41, 0, %s40
      %s43 = sadd.s32 1, %s34
      %s44 = scalar_select %p41, %s43, %s34
      %p45 = scmp.ge.s32.totalorder %s44, 2
      %s46 = scalar_select %p45, 0, %s44
      %s47 = ssub.s32 %s34, %s46
      %s48 = ssub.s32 %s35, %s42
      %s49 = sor.u32 %s47, %s48
      %p50 = scmp.eq.s32.totalorder %s49, 0
      %s52 = sadd.s32 %s51, 1
      %s53 = scalar_select %p50, %s51, %s52
      %p56 = pneg %p50
      %p57 = scmp.eq.s32.totalorder %s27, 1
      %p58 = por %p56, %p57
      %p59 = scmp.ne.s32.totalorder %s51, %s54
      %p60 = scmp.eq.s32.totalorder %s27, 0
      %p61 = por %p59, %p60
      %p62 = scmp.ne.s32.totalorder %s51, %s54
      %p63 = scmp.eq.s32.totalorder %s32, 1
      %p64 = por %p62, %p63
      %p65 = scmp.ne.s32.totalorder %s54, %s55
      %p66 = scmp.eq.s32.totalorder %s32, 0
      %p67 = por %p65, %p66
      %p68 = scmp.ne.s32.totalorder %s54, %s55
      %p69 = scmp.eq.s32.totalorder %s33, 1
      %p70 = por %p68, %p69
      %p72 = scmp.ne.s32.totalorder %s55, %s71
      %p73 = scmp.eq.s32.totalorder %s33, 0
      %p74 = por %p72, %p73
      %s75 = ssub.s32 %s34, %s46
      %p76 = scmp.eq.s32.totalorder %s75, 0
      %s78 = sadd.s32 %s77, 1
      %s79 = scalar_select %p76, %s77, %s78
      %p82 = pneg %p76
      %p83 = scmp.eq.s32.totalorder %s27, 1
      %p84 = por %p82, %p83
      %p85 = scmp.ne.s32.totalorder %s77, %s80
      %p86 = scmp.eq.s32.totalorder %s27, 0
      %p87 = por %p85, %p86
      %p88 = scmp.ne.s32.totalorder %s77, %s80
      %p89 = scmp.eq.s32.totalorder %s32, 1
      %p90 = por %p88, %p89
      %p91 = scmp.ne.s32.totalorder %s80, %s81
      %p92 = scmp.eq.s32.totalorder %s32, 0
      %p93 = por %p91, %p92
      %p94 = scmp.ne.s32.totalorder %s80, %s81
      %p95 = scmp.eq.s32.totalorder %s33, 1
      %p96 = por %p94, %p95
      %p98 = scmp.ne.s32.totalorder %s81, %s97
      %p99 = scmp.eq.s32.totalorder %s33, 0
      %p100 = por %p98, %p99
      %s101 = ssub.s32 %s34, %s46
      %p102 = scmp.eq.s32.totalorder %s101, 0
      %s104 = sadd.s32 %s103, 1
      %s105 = scalar_select %p102, %s103, %s104
      %p108 = pneg %p102
      %p109 = scmp.eq.s32.totalorder %s27, 1
      %p110 = por %p108, %p109
      %p111 = scmp.ne.s32.totalorder %s103, %s106
      %p112 = scmp.eq.s32.totalorder %s27, 0
      %p113 = por %p111, %p112
      %p114 = scmp.ne.s32.totalorder %s103, %s106
      %p115 = scmp.eq.s32.totalorder %s32, 1
      %p116 = por %p114, %p115
      %p117 = scmp.ne.s32.totalorder %s106, %s107
      %p118 = scmp.eq.s32.totalorder %s32, 0
      %p119 = por %p117, %p118
      %p120 = scmp.ne.s32.totalorder %s106, %s107
      %p121 = scmp.eq.s32.totalorder %s33, 1
      %p122 = por %p120, %p121
      %p124 = scmp.ne.s32.totalorder %s107, %s123
      %p125 = scmp.eq.s32.totalorder %s33, 0
      %p126 = por %p124, %p125
      %s128 = sadd.s32 %s127, 1
      %p131 = scmp.eq.s32.totalorder %s27, 1
      %p132 = scmp.ne.s32.totalorder %s127, %s129
      %p133 = scmp.eq.s32.totalorder %s27, 0
      %p134 = por %p132, %p133
      %p135 = scmp.ne.s32.totalorder %s127, %s129
      %p136 = scmp.eq.s32.totalorder %s32, 1
      %p137 = por %p135, %p136
      %p138 = scmp.ne.s32.totalorder %s129, %s130
      %p139 = scmp.eq.s32.totalorder %s32, 0
      %p140 = por %p138, %p139
      %p141 = scmp.ne.s32.totalorder %s129, %s130
      %p142 = scmp.eq.s32.totalorder %s33, 1
      %p143 = por %p141, %p142
      %p145 = scmp.ne.s32.totalorder %s130, %s144
      %p146 = scmp.eq.s32.totalorder %s33, 0
      %p147 = por %p145, %p146
      %s149 = sadd.s32 %s148, 1
      %p152 = scmp.eq.s32.totalorder %s27, 1
      %p153 = scmp.ne.s32.totalorder %s148, %s150
      %p154 = scmp.eq.s32.totalorder %s27, 0
      %p155 = por %p153, %p154
      %p156 = scmp.ne.s32.totalorder %s148, %s150
      %p157 = scmp.eq.s32.totalorder %s32, 1
      %p158 = por %p156, %p157
      %p159 = scmp.ne.s32.totalorder %s150, %s151
      %p160 = scmp.eq.s32.totalorder %s32, 0
      %p161 = por %p159, %p160
      %p162 = scmp.ne.s32.totalorder %s150, %s151
      %p163 = scmp.eq.s32.totalorder %s33, 1
      %p164 = por %p162, %p163
      %p166 = scmp.ne.s32.totalorder %s151, %s165
      %p167 = scmp.eq.s32.totalorder %s33, 0
      %p168 = por %p166, %p167
      %s169 = ssub.s32 %s34, %s46
      %s170 = ssub.s32 %s35, %s42
      %s171 = sor.u32 %s169, %s170
      %p172 = scmp.eq.s32.totalorder %s171, 0
      %s174 = sadd.s32 %s173, 1
      %s175 = scalar_select %p172, %s173, %s174
      %p178 = pneg %p172
      %p179 = scmp.eq.s32.totalorder %s27, 1
      %p180 = por %p178, %p179
      %p181 = scmp.ne.s32.totalorder %s173, %s176
      %p182 = scmp.eq.s32.totalorder %s27, 0
      %p183 = por %p181, %p182
      %p184 = scmp.ne.s32.totalorder %s173, %s176
      %p185 = scmp.eq.s32.totalorder %s32, 1
      %p186 = por %p184, %p185
      %p187 = scmp.ne.s32.totalorder %s176, %s177
      %p188 = scmp.eq.s32.totalorder %s32, 0
      %p189 = por %p187, %p188
      %p190 = scmp.ne.s32.totalorder %s176, %s177
      %p191 = scmp.eq.s32.totalorder %s33, 1
      %p192 = por %p190, %p191
      %p194 = scmp.ne.s32.totalorder %s177, %s193
      %p195 = scmp.eq.s32.totalorder %s33, 0
      %p196 = por %p194, %p195
      %s197 = ssub.s32 %s34, %s46
      %s198 = ssub.s32 %s35, %s42
      %s199 = sor.u32 %s197, %s198
      %p200 = scmp.eq.s32.totalorder %s199, 0
      %s202 = sadd.s32 %s201, 1
      %s203 = scalar_select %p200, %s201, %s202
      %p206 = pneg %p200
      %p207 = scmp.eq.s32.totalorder %s27, 1
      %p208 = por %p206, %p207
      %p209 = scmp.ne.s32.totalorder %s201, %s204
      %p210 = scmp.eq.s32.totalorder %s27, 0
      %p211 = por %p209, %p210
      %p212 = scmp.ne.s32.totalorder %s201, %s204
      %p213 = scmp.eq.s32.totalorder %s32, 1
      %p214 = por %p212, %p213
      %p215 = scmp.ne.s32.totalorder %s204, %s205
      %p216 = scmp.eq.s32.totalorder %s32, 0
      %p217 = por %p215, %p216
      %p218 = scmp.ne.s32.totalorder %s204, %s205
      %p219 = scmp.eq.s32.totalorder %s33, 1
      %p220 = por %p218, %p219
      %p222 = scmp.ne.s32.totalorder %s205, %s221
      %p223 = scmp.eq.s32.totalorder %s33, 0
      %p224 = por %p222, %p223
      %s225 = ssub.s32 %s34, %s46
      %s226 = ssub.s32 %s35, %s42
      %s227 = sor.u32 %s225, %s226
      %p228 = scmp.eq.s32.totalorder %s227, 0
      %s230 = sadd.s32 %s229, 1
      %s231 = scalar_select %p228, %s229, %s230
      %p234 = pneg %p228
      %p235 = scmp.eq.s32.totalorder %s27, 1
      %p236 = por %p234, %p235
      %p237 = scmp.ne.s32.totalorder %s229, %s232
      %p238 = scmp.eq.s32.totalorder %s27, 0
      %p239 = por %p237, %p238
      %p240 = scmp.ne.s32.totalorder %s229, %s232
      %p241 = scmp.eq.s32.totalorder %s32, 1
      %p242 = por %p240, %p241
      %p243 = scmp.ne.s32.totalorder %s232, %s233
      %p244 = scmp.eq.s32.totalorder %s32, 0
      %p245 = por %p243, %p244
      %p246 = scmp.ne.s32.totalorder %s232, %s233
      %p247 = scmp.eq.s32.totalorder %s33, 1
      %p248 = por %p246, %p247
      %p250 = scmp.ne.s32.totalorder %s233, %s249
      %p251 = scmp.eq.s32.totalorder %s33, 0
      %p252 = por %p250, %p251
      %p253 = scmp.le.s32.totalorder 1, %s27
      %p254 = scmp.lt.s32.totalorder %s27, 3
      %p255 = pnand %p253, %p254
      %p256 = pneg %p255
      // Predicated region
      $region9: #{tpu_custom_call.1} parent=5 // pred_check
        _
      $region10: #{tpu_custom_call.1} parent=5 // pred_check_branch
        %258 = sbr.rel (%p255) target = $region12
      $region11: #{tpu_custom_call.1} parent=5 // pred_region
        %s259 = ssub.s32 %s27, 1
        // Predicated region
        $region13: #{tpu_custom_call.1} parent=11 // pred_check
          %p260 = pneg %p140
        $region14: #{tpu_custom_call.1} parent=11 // pred_check_branch
          %262 = sbr.rel (%p260) target = $region16
        $region15: #{tpu_custom_call.1} parent=11 // pred_region
          %264 = vsyncadd [#allocation9], 0
          %s265 = sshll.u32 %s3, 4
          %s266 = int_to_ptr.hbm [resolvable:$true] %s265
          %s267 = sshll.u32 [#allocation8], 4
          %s268 = int_to_ptr.vmem [resolvable:$true] %s267
          %273 = dma.hbm_to_vmem [thread:$0]  %s266, 3072, %s268, [#allocation9], 192, 192, 12
        $region16: #{tpu_custom_call.1} parent=11 // pred_fallthru
          _
        // Predicated region
        $region17: #{tpu_custom_call.1} parent=11 // pred_check
          %p274 = pneg %p161
        $region18: #{tpu_custom_call.1} parent=11 // pred_check_branch
          %276 = sbr.rel (%p274) target = $region20
        $region19: #{tpu_custom_call.1} parent=11 // pred_region
          _
        $region20: #{tpu_custom_call.1} parent=11 // pred_fallthru
          _
      $region12: #{tpu_custom_call.1} parent=5 // pred_fallthru
        _
      %p277 = scmp.lt.s32.totalorder %s27, 2
      // Predicated region
      $region21: #{tpu_custom_call.1} parent=5 // pred_check
        %p278 = pneg %p277
      $region22: #{tpu_custom_call.1} parent=5 // pred_check_branch
        %280 = sbr.rel (%p278) target = $region24
      $region23: #{tpu_custom_call.1} parent=5 // pred_region
        // Predicated region
        $region25: #{tpu_custom_call.1} parent=23 // pred_check
          %p281 = pneg %p61
        $region26: #{tpu_custom_call.1} parent=23 // pred_check_branch
          %283 = sbr.rel (%p281) target = $region28
        $region27: #{tpu_custom_call.1} parent=23 // pred_region
          %s284 = sand.u32 %s51, 1
          %s285 = scalar_lea.sflag [#allocation3], %s284
          %s286 = sand.u32 %s51, 1
          %s287 = smul.addr %s286, 256
          %s288 = scalar_lea.vmem [#allocation2], %s287
          %s289 = smul.u32 32, %s35
          %291 = vsyncadd %s285, 0
          %s292 = smul.addr %s34, 32
          %s293 = sadd.s32 %s289, %s292
          %s294 = smul.addr %s293, 8
          %s295 = scalar_lea.hbm %s0, %s294
          %s296 = sshll.u32 %s295, 4
          %s297 = int_to_ptr.hbm [resolvable:$true] %s296
          %s298 = sshll.u32 %s288, 4
          %s299 = int_to_ptr.vmem [resolvable:$true] %s298
          %304 = dma.hbm_to_vmem [thread:$0]  %s297, 4096, %s299, %s285, 128, 128, 8
        $region28: #{tpu_custom_call.1} parent=23 // pred_fallthru
          _
        // Predicated region
        $region29: #{tpu_custom_call.1} parent=23 // pred_check
          %p305 = pneg %p87
        $region30: #{tpu_custom_call.1} parent=23 // pred_check_branch
          %307 = sbr.rel (%p305) target = $region32
        $region31: #{tpu_custom_call.1} parent=23 // pred_region
          %s308 = sand.u32 %s27, 1
          %s309 = scalar_lea.sflag [#allocation6], %s308
          %s310 = sand.u32 %s77, 1
          %s311 = scalar_lea.vmem [#allocation5], %s310
          %313 = vsyncadd %s309, 0
          %s314 = scalar_lea.hbm %s1, %s34
          %s316 = sshll.u32 %s314, 4
          %s317 = int_to_ptr.hbm [resolvable:$true] %s316
          %s318 = sshll.u32 %s311, 4
          %s319 = int_to_ptr.vmem [resolvable:$true] %s318
          %321 = dma.hbm_to_vmem [thread:$0]  %s317, 16, %s319, %s309
        $region32: #{tpu_custom_call.1} parent=23 // pred_fallthru
          _
        // Predicated region
        $region33: #{tpu_custom_call.1} parent=23 // pred_check
          %p322 = pneg %p113
        $region34: #{tpu_custom_call.1} parent=23 // pred_check_branch
          %324 = sbr.rel (%p322) target = $region36
        $region35: #{tpu_custom_call.1} parent=23 // pred_region
          %s325 = sand.u32 %s27, 1
          %s326 = scalar_lea.sflag [#allocation6], %s325
          %s327 = sand.u32 %s103, 1
          %s328 = scalar_lea.vmem [#allocation7], %s327
          %330 = vsyncadd %s326, 0
          %s331 = scalar_lea.hbm %s2, %s34
          %s333 = sshll.u32 %s331, 4
          %s334 = int_to_ptr.hbm [resolvable:$true] %s333
          %s335 = sshll.u32 %s328, 4
          %s336 = int_to_ptr.vmem [resolvable:$true] %s335
          %338 = dma.hbm_to_vmem [thread:$0]  %s334, 16, %s336, %s326
        $region36: #{tpu_custom_call.1} parent=23 // pred_fallthru
          _
      $region24: #{tpu_custom_call.1} parent=5 // pred_fallthru
        _
      %p339 = scmp.le.s32.totalorder 1, %s27
      %p340 = scmp.lt.s32.totalorder %s27, 3
      %p341 = pnand %p339, %p340
      %p342 = pneg %p341
      // Predicated region
      $region37: #{tpu_custom_call.1} parent=5 // pred_check
        _
      $region38: #{tpu_custom_call.1} parent=5 // pred_check_branch
        %344 = sbr.rel (%p341) target = $region40
      $region39: #{tpu_custom_call.1} parent=5 // pred_region
        %s345 = ssub.s32 %s27, 1
        %s346 = sand.u32 %s54, 1
        %s347 = scalar_lea.sflag [#allocation3], %s346
        %s348 = sand.u32 %s54, 1
        %s349 = smul.addr %s348, 256
        %s350 = scalar_lea.vmem [#allocation2], %s349
        // Predicated region
        $region41: #{tpu_custom_call.1} parent=39 // pred_check
          %p351 = pneg %p67
        $region42: #{tpu_custom_call.1} parent=39 // pred_check_branch
          %353 = sbr.rel (%p351) target = $region44
        $region43: #{tpu_custom_call.1} parent=39 // pred_region
          %355 = dma.done %s347, 4096
        $region44: #{tpu_custom_call.1} parent=39 // pred_fallthru
          _
        %s356 = sand.u32 %s32, 1
        %s357 = scalar_lea.sflag [#allocation6], %s356
        %s358 = sand.u32 %s80, 1
        %s359 = scalar_lea.vmem [#allocation5], %s358
        // Predicated region
        $region45: #{tpu_custom_call.1} parent=39 // pred_check
          %p360 = pneg %p93
        $region46: #{tpu_custom_call.1} parent=39 // pred_check_branch
          %362 = sbr.rel (%p360) target = $region48
        $region47: #{tpu_custom_call.1} parent=39 // pred_region
          %364 = dma.done %s357, 16
        $region48: #{tpu_custom_call.1} parent=39 // pred_fallthru
          _
        %s365 = sand.u32 %s32, 1
        %s366 = scalar_lea.sflag [#allocation6], %s365
        %s367 = sand.u32 %s106, 1
        %s368 = scalar_lea.vmem [#allocation7], %s367
        // Predicated region
        $region49: #{tpu_custom_call.1} parent=39 // pred_check
          %p369 = pneg %p119
        $region50: #{tpu_custom_call.1} parent=39 // pred_check_branch
          %371 = sbr.rel (%p369) target = $region52
        $region51: #{tpu_custom_call.1} parent=39 // pred_region
          %373 = dma.done %s366, 16
        $region52: #{tpu_custom_call.1} parent=39 // pred_fallthru
          _
        // Predicated region
        $region53: #{tpu_custom_call.1} parent=39 // pred_check
          %p374 = pneg %p140
        $region54: #{tpu_custom_call.1} parent=39 // pred_check_branch
          %376 = sbr.rel (%p374) target = $region56
        $region55: #{tpu_custom_call.1} parent=39 // pred_region
          %378 = dma.done [#allocation9], 3072
        $region56: #{tpu_custom_call.1} parent=39 // pred_fallthru
          _
        %s379 = sand.u32 %s54, 1
        %s380 = scalar_lea.sflag [#allocation3], %s379
        %s381 = sand.u32 %s54, 1
        %s382 = smul.addr %s381, 256
        %s383 = scalar_lea.vmem [#allocation2], %s382
        %p384 = pneg %p67
        %p385 = pneg %p64
        %s386 = sand.u32 %s32, 1
        %s387 = scalar_lea.sflag [#allocation6], %s386
        %s388 = sand.u32 %s80, 1
        %s389 = scalar_lea.vmem [#allocation5], %s388
        %p390 = pneg %p93
        %p391 = pneg %p90
        %s392 = sand.u32 %s32, 1
        %s393 = scalar_lea.sflag [#allocation6], %s392
        %s394 = sand.u32 %s106, 1
        %s395 = scalar_lea.vmem [#allocation7], %s394
        %p396 = pneg %p119
        %p397 = pneg %p116
        %p398 = pneg %p140
        %p399 = pneg %p137
        %p400 = pneg %p161
        %p401 = pneg %p158
        %p402 = pneg %p189
        %p403 = pneg %p186
        %s404 = sand.u32 %s176, 1
        %s405 = scalar_lea.sflag [#allocation4], %s404
        %s406 = sand.u32 %s176, 1
        %s407 = smul.addr %s406, 128
        %s408 = scalar_lea.vmem [#allocation10], %s407
        %p409 = pneg %p217
        %p410 = pneg %p214
        %s411 = sand.u32 %s32, 1
        %s412 = scalar_lea.sflag [#allocation12], %s411
        %s413 = sand.u32 %s204, 1
        %s414 = smul.addr %s413, 128
        %s415 = scalar_lea.vmem [#allocation11], %s414
        %p416 = pneg %p245
        %p417 = pneg %p242
        %s418 = sand.u32 %s32, 1
        %s419 = scalar_lea.sflag [#allocation12], %s418
        %s420 = sand.u32 %s232, 1
        %s421 = smul.addr %s420, 128
        %s422 = scalar_lea.vmem [#allocation13], %s421
        %s423 = smul.u32 32, %s37
        %s424 = smul.u32 32, %s37
        %s425 = smul.u32 32, %s37
        %s426 = smul.u32 32, %s37
        %v427 = vld [vmem:[%s350] sm:$0xff]
        %v428 = vld [vmem:[%s350 + $0x8] sm:$0xff]
        %v429 = vld [vmem:[%s350 + $0x10] sm:$0xff]
        %v430 = vld [vmem:[%s350 + $0x18] sm:$0xff]
        %v431 = vld [vmem:[%s350 + $0x20] sm:$0xff]
        %v432 = vld [vmem:[%s350 + $0x28] sm:$0xff]
        %v433 = vld [vmem:[%s350 + $0x30] sm:$0xff]
        %v434 = vld [vmem:[%s350 + $0x38] sm:$0xff]
        %v435 = vld [vmem:[%s350 + $0x40] sm:$0xff]
        %v436 = vld [vmem:[%s350 + $0x48] sm:$0xff]
        %v437 = vld [vmem:[%s350 + $0x50] sm:$0xff]
        %v438 = vld [vmem:[%s350 + $0x58] sm:$0xff]
        %v439 = vld [vmem:[%s350 + $0x60] sm:$0xff]
        %v440 = vld [vmem:[%s350 + $0x68] sm:$0xff]
        %v441 = vld [vmem:[%s350 + $0x70] sm:$0xff]
        %v442 = vld [vmem:[%s350 + $0x78] sm:$0xff]
        %v443 = vld [vmem:[%s350 + $0x80] sm:$0xff]
        %v444 = vld [vmem:[%s350 + $0x88] sm:$0xff]
        %v445 = vld [vmem:[%s350 + $0x90] sm:$0xff]
        %v446 = vld [vmem:[%s350 + $0x98] sm:$0xff]
        %v447 = vld [vmem:[%s350 + $0xa0] sm:$0xff]
        %v448 = vld [vmem:[%s350 + $0xa8] sm:$0xff]
        %v449 = vld [vmem:[%s350 + $0xb0] sm:$0xff]
        %v450 = vld [vmem:[%s350 + $0xb8] sm:$0xff]
        %v451 = vld [vmem:[%s350 + $0xc0] sm:$0xff]
        %v452 = vld [vmem:[%s350 + $0xc8] sm:$0xff]
        %v453 = vld [vmem:[%s350 + $0xd0] sm:$0xff]
        %v454 = vld [vmem:[%s350 + $0xd8] sm:$0xff]
        %v455 = vld [vmem:[%s350 + $0xe0] sm:$0xff]
        %v456 = vld [vmem:[%s350 + $0xe8] sm:$0xff]
        %v457 = vld [vmem:[%s350 + $0xf0] sm:$0xff]
        %v458 = vld [vmem:[%s350 + $0xf8] sm:$0xff]
        %v459 = vld [vmem:[%s359] sm:$0x1]
        %v461 = vperm.slane %v459, 0
        %v463 = vmul.f32 %v427, %v461
        %v464 = vmul.f32 %v428, %v461
        %v465 = vmul.f32 %v429, %v461
        %v466 = vmul.f32 %v430, %v461
        %v467 = vmul.f32 %v431, %v461
        %v468 = vmul.f32 %v432, %v461
        %v469 = vmul.f32 %v433, %v461
        %v470 = vmul.f32 %v434, %v461
        %v471 = vmul.f32 %v435, %v461
        %v472 = vmul.f32 %v436, %v461
        %v473 = vmul.f32 %v437, %v461
        %v474 = vmul.f32 %v438, %v461
        %v475 = vmul.f32 %v439, %v461
        %v476 = vmul.f32 %v440, %v461
        %v477 = vmul.f32 %v441, %v461
        %v478 = vmul.f32 %v442, %v461
        %v479 = vmul.f32 %v443, %v461
        %v480 = vmul.f32 %v444, %v461
        %v481 = vmul.f32 %v445, %v461
        %v482 = vmul.f32 %v446, %v461
        %v483 = vmul.f32 %v447, %v461
        %v484 = vmul.f32 %v448, %v461
        %v485 = vmul.f32 %v449, %v461
        %v486 = vmul.f32 %v450, %v461
        %v487 = vmul.f32 %v451, %v461
        %v488 = vmul.f32 %v452, %v461
        %v489 = vmul.f32 %v453, %v461
        %v490 = vmul.f32 %v454, %v461
        %v491 = vmul.f32 %v455, %v461
        %v492 = vmul.f32 %v456, %v461
        %v493 = vmul.f32 %v457, %v461
        %v494 = vmul.f32 %v458, %v461
        %v495 = vld [vmem:[%s368] sm:$0x1]
        %v497 = vperm.slane %v495, 0
        %v499 = vadd.f32 %v463, %v497
        %v500 = vadd.f32 %v464, %v497
        %v501 = vadd.f32 %v465, %v497
        %v502 = vadd.f32 %v466, %v497
        %v503 = vadd.f32 %v467, %v497
        %v504 = vadd.f32 %v468, %v497
        %v505 = vadd.f32 %v469, %v497
        %v506 = vadd.f32 %v470, %v497
        %v507 = vadd.f32 %v471, %v497
        %v508 = vadd.f32 %v472, %v497
        %v509 = vadd.f32 %v473, %v497
        %v510 = vadd.f32 %v474, %v497
        %v511 = vadd.f32 %v475, %v497
        %v512 = vadd.f32 %v476, %v497
        %v513 = vadd.f32 %v477, %v497
        %v514 = vadd.f32 %v478, %v497
        %v515 = vadd.f32 %v479, %v497
        %v516 = vadd.f32 %v480, %v497
        %v517 = vadd.f32 %v481, %v497
        %v518 = vadd.f32 %v482, %v497
        %v519 = vadd.f32 %v483, %v497
        %v520 = vadd.f32 %v484, %v497
        %v521 = vadd.f32 %v485, %v497
        %v522 = vadd.f32 %v486, %v497
        %v523 = vadd.f32 %v487, %v497
        %v524 = vadd.f32 %v488, %v497
        %v525 = vadd.f32 %v489, %v497
        %v526 = vadd.f32 %v490, %v497
        %v527 = vadd.f32 %v491, %v497
        %v528 = vadd.f32 %v492, %v497
        %v529 = vadd.f32 %v493, %v497
        %v530 = vadd.f32 %v494, %v497
        %v531 = vpack.c.bf16 %v500, %v499
        %v532 = vpack.c.bf16 %v502, %v501
        %v533 = vpack.c.bf16 %v504, %v503
        %v534 = vpack.c.bf16 %v506, %v505
        %v535 = vpack.c.bf16 %v508, %v507
        %v536 = vpack.c.bf16 %v510, %v509
        %v537 = vpack.c.bf16 %v512, %v511
        %v538 = vpack.c.bf16 %v514, %v513
        %v539 = vpack.c.bf16 %v516, %v515
        %v540 = vpack.c.bf16 %v518, %v517
        %v541 = vpack.c.bf16 %v520, %v519
        %v542 = vpack.c.bf16 %v522, %v521
        %v543 = vpack.c.bf16 %v524, %v523
        %v544 = vpack.c.bf16 %v526, %v525
        %v545 = vpack.c.bf16 %v528, %v527
        %v546 = vpack.c.bf16 %v530, %v529
        %v547 = vld [vmem:[#allocation8] sm:$0xff]
        %v548 = vld [vmem:[#allocation8 + $0x8] sm:$0xf]
        %v549 = vld [vmem:[#allocation8 + $0xc] sm:$0xff]
        %v550 = vld [vmem:[#allocation8 + $0x14] sm:$0xf]
        %v551 = vld [vmem:[#allocation8 + $0x18] sm:$0xff]
        %v552 = vld [vmem:[#allocation8 + $0x20] sm:$0xf]
        %v553 = vld [vmem:[#allocation8 + $0x24] sm:$0xff]
        %v554 = vld [vmem:[#allocation8 + $0x2c] sm:$0xf]
        %v555 = vld [vmem:[#allocation8 + $0x30] sm:$0xff]
        %v556 = vld [vmem:[#allocation8 + $0x38] sm:$0xf]
        %v557 = vld [vmem:[#allocation8 + $0x3c] sm:$0xff]
        %v558 = vld [vmem:[#allocation8 + $0x44] sm:$0xf]
        %v559 = vld [vmem:[#allocation8 + $0x48] sm:$0xff]
        %v560 = vld [vmem:[#allocation8 + $0x50] sm:$0xf]
        %v561 = vld [vmem:[#allocation8 + $0x54] sm:$0xff]
        %v562 = vld [vmem:[#allocation8 + $0x5c] sm:$0xf]
        %v563 = vld [vmem:[#allocation8 + $0x60] sm:$0xff]
        %v564 = vld [vmem:[#allocation8 + $0x68] sm:$0xf]
        %v565 = vld [vmem:[#allocation8 + $0x6c] sm:$0xff]
        %v566 = vld [vmem:[#allocation8 + $0x74] sm:$0xf]
        %v567 = vld [vmem:[#allocation8 + $0x78] sm:$0xff]
        %v568 = vld [vmem:[#allocation8 + $0x80] sm:$0xf]
        %v569 = vld [vmem:[#allocation8 + $0x84] sm:$0xff]
        %v570 = vld [vmem:[#allocation8 + $0x8c] sm:$0xf]
        %v571 = vld [vmem:[#allocation8 + $0x90] sm:$0xff]
        %v572 = vld [vmem:[#allocation8 + $0x98] sm:$0xf]
        %v573 = vld [vmem:[#allocation8 + $0x9c] sm:$0xff]
        %v574 = vld [vmem:[#allocation8 + $0xa4] sm:$0xf]
        %v575 = vld [vmem:[#allocation8 + $0xa8] sm:$0xff]
        %v576 = vld [vmem:[#allocation8 + $0xb0] sm:$0xf]
        %v577 = vld [vmem:[#allocation8 + $0xb4] sm:$0xff]
        %v578 = vld [vmem:[#allocation8 + $0xbc] sm:$0xf]
        %v579 = vld [vmem:[%s4] sm:$0x7]
        %v581 = vperm.slane %v579, 0
        %v582 = vperm.slane %v579, 1
        %v583 = vperm.slane %v579, 2
        %v619 = vunpack.c.l.b16 %v547
        %v620 = vunpack.c.h.b16 %v547
        %v621 = vunpack.c.l.b16 %v548
        %v622 = vunpack.c.l.b16 %v549
        %v623 = vunpack.c.h.b16 %v549
        %v624 = vunpack.c.l.b16 %v550
        %v625 = vunpack.c.l.b16 %v551
        %v626 = vunpack.c.h.b16 %v551
        %v627 = vunpack.c.l.b16 %v552
        %v628 = vunpack.c.l.b16 %v553
        %v629 = vunpack.c.h.b16 %v553
        %v630 = vunpack.c.l.b16 %v554
        %v631 = vunpack.c.l.b16 %v555
        %v632 = vunpack.c.h.b16 %v555
        %v633 = vunpack.c.l.b16 %v556
        %v634 = vunpack.c.l.b16 %v557
        %v635 = vunpack.c.h.b16 %v557
        %v636 = vunpack.c.l.b16 %v558
        %v637 = vunpack.c.l.b16 %v559
        %v638 = vunpack.c.h.b16 %v559
        %v639 = vunpack.c.l.b16 %v560
        %v640 = vunpack.c.l.b16 %v561
        %v641 = vunpack.c.h.b16 %v561
        %v642 = vunpack.c.l.b16 %v562
        %v643 = vunpack.c.l.b16 %v563
        %v644 = vunpack.c.h.b16 %v563
        %v645 = vunpack.c.l.b16 %v564
        %v646 = vunpack.c.l.b16 %v565
        %v647 = vunpack.c.h.b16 %v565
        %v648 = vunpack.c.l.b16 %v566
        %v649 = vunpack.c.l.b16 %v567
        %v650 = vunpack.c.h.b16 %v567
        %v651 = vunpack.c.l.b16 %v568
        %v652 = vunpack.c.l.b16 %v569
        %v653 = vunpack.c.h.b16 %v569
        %v654 = vunpack.c.l.b16 %v570
        %v655 = vunpack.c.l.b16 %v571
        %v656 = vunpack.c.h.b16 %v571
        %v657 = vunpack.c.l.b16 %v572
        %v658 = vunpack.c.l.b16 %v573
        %v659 = vunpack.c.h.b16 %v573
        %v660 = vunpack.c.l.b16 %v574
        %v661 = vunpack.c.l.b16 %v575
        %v662 = vunpack.c.h.b16 %v575
        %v663 = vunpack.c.l.b16 %v576
        %v664 = vunpack.c.l.b16 %v577
        %v665 = vunpack.c.h.b16 %v577
        %v666 = vunpack.c.l.b16 %v578
        %v667 = vpack.c.b16 %v622, %v619
        %v668 = vpack.c.b16 %v623, %v620
        %v669 = vpack.c.b16 %v624, %v621
        %v670 = vpack.c.b16 %v628, %v625
        %v671 = vpack.c.b16 %v629, %v626
        %v672 = vpack.c.b16 %v630, %v627
        %v673 = vpack.c.b16 %v634, %v631
        %v674 = vpack.c.b16 %v635, %v632
        %v675 = vpack.c.b16 %v636, %v633
        %v676 = vpack.c.b16 %v640, %v637
        %v677 = vpack.c.b16 %v641, %v638
        %v678 = vpack.c.b16 %v642, %v639
        %v679 = vpack.c.b16 %v646, %v643
        %v680 = vpack.c.b16 %v647, %v644
        %v681 = vpack.c.b16 %v648, %v645
        %v682 = vpack.c.b16 %v652, %v649
        %v683 = vpack.c.b16 %v653, %v650
        %v684 = vpack.c.b16 %v654, %v651
        %v685 = vpack.c.b16 %v658, %v655
        %v686 = vpack.c.b16 %v659, %v656
        %v687 = vpack.c.b16 %v660, %v657
        %v688 = vpack.c.b16 %v664, %v661
        %v689 = vpack.c.b16 %v665, %v662
        %v690 = vpack.c.b16 %v666, %v663
        %715 = vmatpush.bf16.msra.mxu0 %v688
        %716 = vmatpush.bf16.msra.mxu0 %v685
        %717 = vmatpush.bf16.msra.mxu0 %v682
        %718 = vmatpush.bf16.msra.mxu0 %v679
        %719 = vmatpush.bf16.msra.mxu0 %v676
        %720 = vmatpush.bf16.msra.mxu0 %v673
        %721 = vmatpush.bf16.msra.mxu0 %v670
        %722 = vmatpush.bf16.msra.mxu0 %v667
        %723 = vmatmul.bf16.gmra.mxu0 %v531
        %v724 = vpop.f32.mrf.mxu0
        %v725 = vadd.f32 %v581, %v724
        %v726 = vpop.f32.mrf.mxu0
        %v727 = vadd.f32 %v581, %v726
        %728 = vmatmul.bf16.gmra.mxu0 %v532
        %v729 = vpop.f32.mrf.mxu0
        %v730 = vadd.f32 %v581, %v729
        %v731 = vpop.f32.mrf.mxu0
        %v732 = vadd.f32 %v581, %v731
        %733 = vmatmul.bf16.gmra.mxu0 %v533
        %v734 = vpop.f32.mrf.mxu0
        %v735 = vadd.f32 %v581, %v734
        %v736 = vpop.f32.mrf.mxu0
        %v737 = vadd.f32 %v581, %v736
        %738 = vmatmul.bf16.gmra.mxu0 %v534
        %v739 = vpop.f32.mrf.mxu0
        %v740 = vadd.f32 %v581, %v739
        %v741 = vpop.f32.mrf.mxu0
        %v742 = vadd.f32 %v581, %v741
        %743 = vmatmul.bf16.gmra.mxu0 %v535
        %v744 = vpop.f32.mrf.mxu0
        %v745 = vadd.f32 %v581, %v744
        %v746 = vpop.f32.mrf.mxu0
        %v747 = vadd.f32 %v581, %v746
        %748 = vmatmul.bf16.gmra.mxu0 %v536
        %v749 = vpop.f32.mrf.mxu0
        %v750 = vadd.f32 %v581, %v749
        %v751 = vpop.f32.mrf.mxu0
        %v752 = vadd.f32 %v581, %v751
        %753 = vmatmul.bf16.gmra.mxu0 %v537
        %v754 = vpop.f32.mrf.mxu0
        %v755 = vadd.f32 %v581, %v754
        %v756 = vpop.f32.mrf.mxu0
        %v757 = vadd.f32 %v581, %v756
        %758 = vmatmul.bf16.gmra.mxu0 %v538
        %v759 = vpop.f32.mrf.mxu0
        %v760 = vadd.f32 %v581, %v759
        %v761 = vpop.f32.mrf.mxu0
        %v762 = vadd.f32 %v581, %v761
        %763 = vmatmul.bf16.gmra.mxu0 %v539
        %v764 = vpop.f32.mrf.mxu0
        %v765 = vadd.f32 %v581, %v764
        %v766 = vpop.f32.mrf.mxu0
        %v767 = vadd.f32 %v581, %v766
        %768 = vmatmul.bf16.gmra.mxu0 %v540
        %v769 = vpop.f32.mrf.mxu0
        %v770 = vadd.f32 %v581, %v769
        %v771 = vpop.f32.mrf.mxu0
        %v772 = vadd.f32 %v581, %v771
        %773 = vmatmul.bf16.gmra.mxu0 %v541
        %v774 = vpop.f32.mrf.mxu0
        %v775 = vadd.f32 %v581, %v774
        %v776 = vpop.f32.mrf.mxu0
        %v777 = vadd.f32 %v581, %v776
        %778 = vmatmul.bf16.gmra.mxu0 %v542
        %v779 = vpop.f32.mrf.mxu0
        %v780 = vadd.f32 %v581, %v779
        %v781 = vpop.f32.mrf.mxu0
        %v782 = vadd.f32 %v581, %v781
        %783 = vmatmul.bf16.gmra.mxu0 %v543
        %v784 = vpop.f32.mrf.mxu0
        %v785 = vadd.f32 %v581, %v784
        %v786 = vpop.f32.mrf.mxu0
        %v787 = vadd.f32 %v581, %v786
        %788 = vmatmul.bf16.gmra.mxu0 %v544
        %v789 = vpop.f32.mrf.mxu0
        %v790 = vadd.f32 %v581, %v789
        %v791 = vpop.f32.mrf.mxu0
        %v792 = vadd.f32 %v581, %v791
        %793 = vmatmul.bf16.gmra.mxu0 %v545
        %v794 = vpop.f32.mrf.mxu0
        %v795 = vadd.f32 %v581, %v794
        %v796 = vpop.f32.mrf.mxu0
        %v797 = vadd.f32 %v581, %v796
        %798 = vmatmul.bf16.gmra.mxu0 %v546
        %v799 = vpop.f32.mrf.mxu0
        %v800 = vadd.f32 %v581, %v799
        %v801 = vpop.f32.mrf.mxu0
        %v802 = vadd.f32 %v581, %v801
        %803 = vdwg.mxu0
        %804 = vmatpush.bf16.msra.mxu0 %v689
        %805 = vmatpush.bf16.msra.mxu0 %v686
        %806 = vmatpush.bf16.msra.mxu0 %v683
        %807 = vmatpush.bf16.msra.mxu0 %v680
        %808 = vmatpush.bf16.msra.mxu0 %v677
        %809 = vmatpush.bf16.msra.mxu0 %v674
        %810 = vmatpush.bf16.msra.mxu0 %v671
        %811 = vmatpush.bf16.msra.mxu0 %v668
        %812 = vmatmul.bf16.gmra.mxu0 %v531
        %v813 = vpop.f32.mrf.mxu0
        %v814 = vadd.f32 %v582, %v813
        %v815 = vpop.f32.mrf.mxu0
        %v816 = vadd.f32 %v582, %v815
        %817 = vmatmul.bf16.gmra.mxu0 %v532
        %v818 = vpop.f32.mrf.mxu0
        %v819 = vadd.f32 %v582, %v818
        %v820 = vpop.f32.mrf.mxu0
        %v821 = vadd.f32 %v582, %v820
        %822 = vmatmul.bf16.gmra.mxu0 %v533
        %v823 = vpop.f32.mrf.mxu0
        %v824 = vadd.f32 %v582, %v823
        %v825 = vpop.f32.mrf.mxu0
        %v826 = vadd.f32 %v582, %v825
        %827 = vmatmul.bf16.gmra.mxu0 %v534
        %v828 = vpop.f32.mrf.mxu0
        %v829 = vadd.f32 %v582, %v828
        %v830 = vpop.f32.mrf.mxu0
        %v831 = vadd.f32 %v582, %v830
        %832 = vmatmul.bf16.gmra.mxu0 %v535
        %v833 = vpop.f32.mrf.mxu0
        %v834 = vadd.f32 %v582, %v833
        %v835 = vpop.f32.mrf.mxu0
        %v836 = vadd.f32 %v582, %v835
        %837 = vmatmul.bf16.gmra.mxu0 %v536
        %v838 = vpop.f32.mrf.mxu0
        %v839 = vadd.f32 %v582, %v838
        %v840 = vpop.f32.mrf.mxu0
        %v841 = vadd.f32 %v582, %v840
        %842 = vmatmul.bf16.gmra.mxu0 %v537
        %v843 = vpop.f32.mrf.mxu0
        %v844 = vadd.f32 %v582, %v843
        %v845 = vpop.f32.mrf.mxu0
        %v846 = vadd.f32 %v582, %v845
        %847 = vmatmul.bf16.gmra.mxu0 %v538
        %v848 = vpop.f32.mrf.mxu0
        %v849 = vadd.f32 %v582, %v848
        %v850 = vpop.f32.mrf.mxu0
        %v851 = vadd.f32 %v582, %v850
        %852 = vmatmul.bf16.gmra.mxu0 %v539
        %v853 = vpop.f32.mrf.mxu0
        %v854 = vadd.f32 %v582, %v853
        %v855 = vpop.f32.mrf.mxu0
        %v856 = vadd.f32 %v582, %v855
        %857 = vmatmul.bf16.gmra.mxu0 %v540
        %v858 = vpop.f32.mrf.mxu0
        %v859 = vadd.f32 %v582, %v858
        %v860 = vpop.f32.mrf.mxu0
        %v861 = vadd.f32 %v582, %v860
        %862 = vmatmul.bf16.gmra.mxu0 %v541
        %v863 = vpop.f32.mrf.mxu0
        %v864 = vadd.f32 %v582, %v863
        %v865 = vpop.f32.mrf.mxu0
        %v866 = vadd.f32 %v582, %v865
        %867 = vmatmul.bf16.gmra.mxu0 %v542
        %v868 = vpop.f32.mrf.mxu0
        %v869 = vadd.f32 %v582, %v868
        %v870 = vpop.f32.mrf.mxu0
        %v871 = vadd.f32 %v582, %v870
        %872 = vmatmul.bf16.gmra.mxu0 %v543
        %v873 = vpop.f32.mrf.mxu0
        %v874 = vadd.f32 %v582, %v873
        %v875 = vpop.f32.mrf.mxu0
        %v876 = vadd.f32 %v582, %v875
        %877 = vmatmul.bf16.gmra.mxu0 %v544
        %v878 = vpop.f32.mrf.mxu0
        %v879 = vadd.f32 %v582, %v878
        %v880 = vpop.f32.mrf.mxu0
        %v881 = vadd.f32 %v582, %v880
        %882 = vmatmul.bf16.gmra.mxu0 %v545
        %v883 = vpop.f32.mrf.mxu0
        %v884 = vadd.f32 %v582, %v883
        %v885 = vpop.f32.mrf.mxu0
        %v886 = vadd.f32 %v582, %v885
        %887 = vmatmul.bf16.gmra.mxu0 %v546
        %v888 = vpop.f32.mrf.mxu0
        %v889 = vadd.f32 %v582, %v888
        %v890 = vpop.f32.mrf.mxu0
        %v891 = vadd.f32 %v582, %v890
        %892 = vdwg.mxu0
        %893 = vmatpush.bf16.msra.mxu0 %v690
        %894 = vmatpush.bf16.msra.mxu0 %v687
        %895 = vmatpush.bf16.msra.mxu0 %v684
        %896 = vmatpush.bf16.msra.mxu0 %v681
        %897 = vmatpush.bf16.msra.mxu0 %v678
        %898 = vmatpush.bf16.msra.mxu0 %v675
        %899 = vmatpush.bf16.msra.mxu0 %v672
        %900 = vmatpush.bf16.msra.mxu0 %v669
        %901 = vmatmul.bf16.gmra.mxu0 %v531
        %v902 = vpop.f32.mrf.mxu0
        %v903 = vadd.f32 %v583, %v902
        %v904 = vpop.f32.mrf.mxu0
        %v905 = vadd.f32 %v583, %v904
        %906 = vmatmul.bf16.gmra.mxu0 %v532
        %v907 = vpop.f32.mrf.mxu0
        %v908 = vadd.f32 %v583, %v907
        %v909 = vpop.f32.mrf.mxu0
        %v910 = vadd.f32 %v583, %v909
        %911 = vmatmul.bf16.gmra.mxu0 %v533
        %v912 = vpop.f32.mrf.mxu0
        %v913 = vadd.f32 %v583, %v912
        %v914 = vpop.f32.mrf.mxu0
        %v915 = vadd.f32 %v583, %v914
        %916 = vmatmul.bf16.gmra.mxu0 %v534
        %v917 = vpop.f32.mrf.mxu0
        %v918 = vadd.f32 %v583, %v917
        %v919 = vpop.f32.mrf.mxu0
        %v920 = vadd.f32 %v583, %v919
        %921 = vmatmul.bf16.gmra.mxu0 %v535
        %v922 = vpop.f32.mrf.mxu0
        %v923 = vadd.f32 %v583, %v922
        %v924 = vpop.f32.mrf.mxu0
        %v925 = vadd.f32 %v583, %v924
        %926 = vmatmul.bf16.gmra.mxu0 %v536
        %v927 = vpop.f32.mrf.mxu0
        %v928 = vadd.f32 %v583, %v927
        %v929 = vpop.f32.mrf.mxu0
        %v930 = vadd.f32 %v583, %v929
        %931 = vmatmul.bf16.gmra.mxu0 %v537
        %v932 = vpop.f32.mrf.mxu0
        %v933 = vadd.f32 %v583, %v932
        %v934 = vpop.f32.mrf.mxu0
        %v935 = vadd.f32 %v583, %v934
        %936 = vmatmul.bf16.gmra.mxu0 %v538
        %v937 = vpop.f32.mrf.mxu0
        %v938 = vadd.f32 %v583, %v937
        %v939 = vpop.f32.mrf.mxu0
        %v940 = vadd.f32 %v583, %v939
        %941 = vmatmul.bf16.gmra.mxu0 %v539
        %v942 = vpop.f32.mrf.mxu0
        %v943 = vadd.f32 %v583, %v942
        %v944 = vpop.f32.mrf.mxu0
        %v945 = vadd.f32 %v583, %v944
        %946 = vmatmul.bf16.gmra.mxu0 %v540
        %v947 = vpop.f32.mrf.mxu0
        %v948 = vadd.f32 %v583, %v947
        %v949 = vpop.f32.mrf.mxu0
        %v950 = vadd.f32 %v583, %v949
        %951 = vmatmul.bf16.gmra.mxu0 %v541
        %v952 = vpop.f32.mrf.mxu0
        %v953 = vadd.f32 %v583, %v952
        %v954 = vpop.f32.mrf.mxu0
        %v955 = vadd.f32 %v583, %v954
        %956 = vmatmul.bf16.gmra.mxu0 %v542
        %v957 = vpop.f32.mrf.mxu0
        %v958 = vadd.f32 %v583, %v957
        %v959 = vpop.f32.mrf.mxu0
        %v960 = vadd.f32 %v583, %v959
        %961 = vmatmul.bf16.gmra.mxu0 %v543
        %v962 = vpop.f32.mrf.mxu0
        %v963 = vadd.f32 %v583, %v962
        %v964 = vpop.f32.mrf.mxu0
        %v965 = vadd.f32 %v583, %v964
        %966 = vmatmul.bf16.gmra.mxu0 %v544
        %v967 = vpop.f32.mrf.mxu0
        %v968 = vadd.f32 %v583, %v967
        %v969 = vpop.f32.mrf.mxu0
        %v970 = vadd.f32 %v583, %v969
        %971 = vmatmul.bf16.gmra.mxu0 %v545
        %v972 = vpop.f32.mrf.mxu0
        %v973 = vadd.f32 %v583, %v972
        %v974 = vpop.f32.mrf.mxu0
        %v975 = vadd.f32 %v583, %v974
        %976 = vmatmul.bf16.gmra.mxu0 %v546
        %v977 = vpop.f32.mrf.mxu0
        %v978 = vadd.f32 %v583, %v977
        %v979 = vpop.f32.mrf.mxu0
        %v980 = vadd.f32 %v583, %v979
        %981 = vdwg.mxu0
        %v982 = vpack.c.bf16 %v725, %v725
        %v983 = vpack.c.bf16 %v727, %v727
        %v984 = vpack.c.bf16 %v730, %v730
        %v985 = vpack.c.bf16 %v732, %v732
        %v986 = vpack.c.bf16 %v735, %v735
        %v987 = vpack.c.bf16 %v737, %v737
        %v988 = vpack.c.bf16 %v740, %v740
        %v989 = vpack.c.bf16 %v742, %v742
        %v990 = vpack.c.bf16 %v745, %v745
        %v991 = vpack.c.bf16 %v747, %v747
        %v992 = vpack.c.bf16 %v750, %v750
        %v993 = vpack.c.bf16 %v752, %v752
        %v994 = vpack.c.bf16 %v755, %v755
        %v995 = vpack.c.bf16 %v757, %v757
        %v996 = vpack.c.bf16 %v760, %v760
        %v997 = vpack.c.bf16 %v762, %v762
        %v998 = vpack.c.bf16 %v765, %v765
        %v999 = vpack.c.bf16 %v767, %v767
        %v1000 = vpack.c.bf16 %v770, %v770
        %v1001 = vpack.c.bf16 %v772, %v772
        %v1002 = vpack.c.bf16 %v775, %v775
        %v1003 = vpack.c.bf16 %v777, %v777
        %v1004 = vpack.c.bf16 %v780, %v780
        %v1005 = vpack.c.bf16 %v782, %v782
        %v1006 = vpack.c.bf16 %v785, %v785
        %v1007 = vpack.c.bf16 %v787, %v787
        %v1008 = vpack.c.bf16 %v790, %v790
        %v1009 = vpack.c.bf16 %v792, %v792
        %v1010 = vpack.c.bf16 %v795, %v795
        %v1011 = vpack.c.bf16 %v797, %v797
        %v1012 = vpack.c.bf16 %v800, %v800
        %v1013 = vpack.c.bf16 %v802, %v802
        %1014 = vst [vmem:[%s408] sm:$0xf] %v982
        %1015 = vst [vmem:[%s408 + $0x4] sm:$0xf] %v983
        %1016 = vst [vmem:[%s408 + $0x8] sm:$0xf] %v984
        %1017 = vst [vmem:[%s408 + $0xc] sm:$0xf] %v985
        %1018 = vst [vmem:[%s408 + $0x10] sm:$0xf] %v986
        %1019 = vst [vmem:[%s408 + $0x14] sm:$0xf] %v987
        %1020 = vst [vmem:[%s408 + $0x18] sm:$0xf] %v988
        %1021 = vst [vmem:[%s408 + $0x1c] sm:$0xf] %v989
        %1022 = vst [vmem:[%s408 + $0x20] sm:$0xf] %v990
        %1023 = vst [vmem:[%s408 + $0x24] sm:$0xf] %v991
        %1024 = vst [vmem:[%s408 + $0x28] sm:$0xf] %v992
        %1025 = vst [vmem:[%s408 + $0x2c] sm:$0xf] %v993
        %1026 = vst [vmem:[%s408 + $0x30] sm:$0xf] %v994
        %1027 = vst [vmem:[%s408 + $0x34] sm:$0xf] %v995
        %1028 = vst [vmem:[%s408 + $0x38] sm:$0xf] %v996
        %1029 = vst [vmem:[%s408 + $0x3c] sm:$0xf] %v997
        %1030 = vst [vmem:[%s408 + $0x40] sm:$0xf] %v998
        %1031 = vst [vmem:[%s408 + $0x44] sm:$0xf] %v999
        %1032 = vst [vmem:[%s408 + $0x48] sm:$0xf] %v1000
        %1033 = vst [vmem:[%s408 + $0x4c] sm:$0xf] %v1001
        %1034 = vst [vmem:[%s408 + $0x50] sm:$0xf] %v1002
        %1035 = vst [vmem:[%s408 + $0x54] sm:$0xf] %v1003
        %1036 = vst [vmem:[%s408 + $0x58] sm:$0xf] %v1004
        %1037 = vst [vmem:[%s408 + $0x5c] sm:$0xf] %v1005
        %1038 = vst [vmem:[%s408 + $0x60] sm:$0xf] %v1006
        %1039 = vst [vmem:[%s408 + $0x64] sm:$0xf] %v1007
        %1040 = vst [vmem:[%s408 + $0x68] sm:$0xf] %v1008
        %1041 = vst [vmem:[%s408 + $0x6c] sm:$0xf] %v1009
        %1042 = vst [vmem:[%s408 + $0x70] sm:$0xf] %v1010
        %1043 = vst [vmem:[%s408 + $0x74] sm:$0xf] %v1011
        %1044 = vst [vmem:[%s408 + $0x78] sm:$0xf] %v1012
        %1045 = vst [vmem:[%s408 + $0x7c] sm:$0xf] %v1013
        %v1046 = vpack.c.bf16 %v814, %v814
        %v1047 = vpack.c.bf16 %v816, %v816
        %v1048 = vpack.c.bf16 %v819, %v819
        %v1049 = vpack.c.bf16 %v821, %v821
        %v1050 = vpack.c.bf16 %v824, %v824
        %v1051 = vpack.c.bf16 %v826, %v826
        %v1052 = vpack.c.bf16 %v829, %v829
        %v1053 = vpack.c.bf16 %v831, %v831
        %v1054 = vpack.c.bf16 %v834, %v834
        %v1055 = vpack.c.bf16 %v836, %v836
        %v1056 = vpack.c.bf16 %v839, %v839
        %v1057 = vpack.c.bf16 %v841, %v841
        %v1058 = vpack.c.bf16 %v844, %v844
        %v1059 = vpack.c.bf16 %v846, %v846
        %v1060 = vpack.c.bf16 %v849, %v849
        %v1061 = vpack.c.bf16 %v851, %v851
        %v1062 = vpack.c.bf16 %v854, %v854
        %v1063 = vpack.c.bf16 %v856, %v856
        %v1064 = vpack.c.bf16 %v859, %v859
        %v1065 = vpack.c.bf16 %v861, %v861
        %v1066 = vpack.c.bf16 %v864, %v864
        %v1067 = vpack.c.bf16 %v866, %v866
        %v1068 = vpack.c.bf16 %v869, %v869
        %v1069 = vpack.c.bf16 %v871, %v871
        %v1070 = vpack.c.bf16 %v874, %v874
        %v1071 = vpack.c.bf16 %v876, %v876
        %v1072 = vpack.c.bf16 %v879, %v879
        %v1073 = vpack.c.bf16 %v881, %v881
        %v1074 = vpack.c.bf16 %v884, %v884
        %v1075 = vpack.c.bf16 %v886, %v886
        %v1076 = vpack.c.bf16 %v889, %v889
        %v1077 = vpack.c.bf16 %v891, %v891
        %1078 = vst [vmem:[%s415] sm:$0xf] %v1046
        %1079 = vst [vmem:[%s415 + $0x4] sm:$0xf] %v1047
        %1080 = vst [vmem:[%s415 + $0x8] sm:$0xf] %v1048
        %1081 = vst [vmem:[%s415 + $0xc] sm:$0xf] %v1049
        %1082 = vst [vmem:[%s415 + $0x10] sm:$0xf] %v1050
        %1083 = vst [vmem:[%s415 + $0x14] sm:$0xf] %v1051
        %1084 = vst [vmem:[%s415 + $0x18] sm:$0xf] %v1052
        %1085 = vst [vmem:[%s415 + $0x1c] sm:$0xf] %v1053
        %1086 = vst [vmem:[%s415 + $0x20] sm:$0xf] %v1054
        %1087 = vst [vmem:[%s415 + $0x24] sm:$0xf] %v1055
        %1088 = vst [vmem:[%s415 + $0x28] sm:$0xf] %v1056
        %1089 = vst [vmem:[%s415 + $0x2c] sm:$0xf] %v1057
        %1090 = vst [vmem:[%s415 + $0x30] sm:$0xf] %v1058
        %1091 = vst [vmem:[%s415 + $0x34] sm:$0xf] %v1059
        %1092 = vst [vmem:[%s415 + $0x38] sm:$0xf] %v1060
        %1093 = vst [vmem:[%s415 + $0x3c] sm:$0xf] %v1061
        %1094 = vst [vmem:[%s415 + $0x40] sm:$0xf] %v1062
        %1095 = vst [vmem:[%s415 + $0x44] sm:$0xf] %v1063
        %1096 = vst [vmem:[%s415 + $0x48] sm:$0xf] %v1064
        %1097 = vst [vmem:[%s415 + $0x4c] sm:$0xf] %v1065
        %1098 = vst [vmem:[%s415 + $0x50] sm:$0xf] %v1066
        %1099 = vst [vmem:[%s415 + $0x54] sm:$0xf] %v1067
        %1100 = vst [vmem:[%s415 + $0x58] sm:$0xf] %v1068
        %1101 = vst [vmem:[%s415 + $0x5c] sm:$0xf] %v1069
        %1102 = vst [vmem:[%s415 + $0x60] sm:$0xf] %v1070
        %1103 = vst [vmem:[%s415 + $0x64] sm:$0xf] %v1071
        %1104 = vst [vmem:[%s415 + $0x68] sm:$0xf] %v1072
        %1105 = vst [vmem:[%s415 + $0x6c] sm:$0xf] %v1073
        %1106 = vst [vmem:[%s415 + $0x70] sm:$0xf] %v1074
        %1107 = vst [vmem:[%s415 + $0x74] sm:$0xf] %v1075
        %1108 = vst [vmem:[%s415 + $0x78] sm:$0xf] %v1076
        %1109 = vst [vmem:[%s415 + $0x7c] sm:$0xf] %v1077
        %v1110 = vpack.c.bf16 %v903, %v903
        %v1111 = vpack.c.bf16 %v905, %v905
        %v1112 = vpack.c.bf16 %v908, %v908
        %v1113 = vpack.c.bf16 %v910, %v910
        %v1114 = vpack.c.bf16 %v913, %v913
        %v1115 = vpack.c.bf16 %v915, %v915
        %v1116 = vpack.c.bf16 %v918, %v918
        %v1117 = vpack.c.bf16 %v920, %v920
        %v1118 = vpack.c.bf16 %v923, %v923
        %v1119 = vpack.c.bf16 %v925, %v925
        %v1120 = vpack.c.bf16 %v928, %v928
        %v1121 = vpack.c.bf16 %v930, %v930
        %v1122 = vpack.c.bf16 %v933, %v933
        %v1123 = vpack.c.bf16 %v935, %v935
        %v1124 = vpack.c.bf16 %v938, %v938
        %v1125 = vpack.c.bf16 %v940, %v940
        %v1126 = vpack.c.bf16 %v943, %v943
        %v1127 = vpack.c.bf16 %v945, %v945
        %v1128 = vpack.c.bf16 %v948, %v948
        %v1129 = vpack.c.bf16 %v950, %v950
        %v1130 = vpack.c.bf16 %v953, %v953
        %v1131 = vpack.c.bf16 %v955, %v955
        %v1132 = vpack.c.bf16 %v958, %v958
        %v1133 = vpack.c.bf16 %v960, %v960
        %v1134 = vpack.c.bf16 %v963, %v963
        %v1135 = vpack.c.bf16 %v965, %v965
        %v1136 = vpack.c.bf16 %v968, %v968
        %v1137 = vpack.c.bf16 %v970, %v970
        %v1138 = vpack.c.bf16 %v973, %v973
        %v1139 = vpack.c.bf16 %v975, %v975
        %v1140 = vpack.c.bf16 %v978, %v978
        %v1141 = vpack.c.bf16 %v980, %v980
        %1142 = vst [vmem:[%s422] sm:$0xf] %v1110
        %1143 = vst [vmem:[%s422 + $0x4] sm:$0xf] %v1111
        %1144 = vst [vmem:[%s422 + $0x8] sm:$0xf] %v1112
        %1145 = vst [vmem:[%s422 + $0xc] sm:$0xf] %v1113
        %1146 = vst [vmem:[%s422 + $0x10] sm:$0xf] %v1114
        %1147 = vst [vmem:[%s422 + $0x14] sm:$0xf] %v1115
        %1148 = vst [vmem:[%s422 + $0x18] sm:$0xf] %v1116
        %1149 = vst [vmem:[%s422 + $0x1c] sm:$0xf] %v1117
        %1150 = vst [vmem:[%s422 + $0x20] sm:$0xf] %v1118
        %1151 = vst [vmem:[%s422 + $0x24] sm:$0xf] %v1119
        %1152 = vst [vmem:[%s422 + $0x28] sm:$0xf] %v1120
        %1153 = vst [vmem:[%s422 + $0x2c] sm:$0xf] %v1121
        %1154 = vst [vmem:[%s422 + $0x30] sm:$0xf] %v1122
        %1155 = vst [vmem:[%s422 + $0x34] sm:$0xf] %v1123
        %1156 = vst [vmem:[%s422 + $0x38] sm:$0xf] %v1124
        %1157 = vst [vmem:[%s422 + $0x3c] sm:$0xf] %v1125
        %1158 = vst [vmem:[%s422 + $0x40] sm:$0xf] %v1126
        %1159 = vst [vmem:[%s422 + $0x44] sm:$0xf] %v1127
        %1160 = vst [vmem:[%s422 + $0x48] sm:$0xf] %v1128
        %1161 = vst [vmem:[%s422 + $0x4c] sm:$0xf] %v1129
        %1162 = vst [vmem:[%s422 + $0x50] sm:$0xf] %v1130
        %1163 = vst [vmem:[%s422 + $0x54] sm:$0xf] %v1131
        %1164 = vst [vmem:[%s422 + $0x58] sm:$0xf] %v1132
        %1165 = vst [vmem:[%s422 + $0x5c] sm:$0xf] %v1133
        %1166 = vst [vmem:[%s422 + $0x60] sm:$0xf] %v1134
        %1167 = vst [vmem:[%s422 + $0x64] sm:$0xf] %v1135
        %1168 = vst [vmem:[%s422 + $0x68] sm:$0xf] %v1136
        %1169 = vst [vmem:[%s422 + $0x6c] sm:$0xf] %v1137
        %1170 = vst [vmem:[%s422 + $0x70] sm:$0xf] %v1138
        %1171 = vst [vmem:[%s422 + $0x74] sm:$0xf] %v1139
        %1172 = vst [vmem:[%s422 + $0x78] sm:$0xf] %v1140
        %1173 = vst [vmem:[%s422 + $0x7c] sm:$0xf] %v1141
        %s1174 = sand.u32 %s176, 1
        %s1175 = scalar_lea.sflag [#allocation4], %s1174
        %s1176 = sand.u32 %s176, 1
        %s1177 = smul.addr %s1176, 128
        %s1178 = scalar_lea.vmem [#allocation10], %s1177
        %s1179 = sand.u32 %s32, 1
        %s1180 = scalar_lea.sflag [#allocation12], %s1179
        %s1181 = sand.u32 %s204, 1
        %s1182 = smul.addr %s1181, 128
        %s1183 = scalar_lea.vmem [#allocation11], %s1182
        %s1184 = sand.u32 %s32, 1
        %s1185 = scalar_lea.sflag [#allocation12], %s1184
        %s1186 = sand.u32 %s232, 1
        %s1187 = smul.addr %s1186, 128
        %s1188 = scalar_lea.vmem [#allocation13], %s1187
        // Predicated region
        $region57: #{tpu_custom_call.1} parent=39 // pred_check
          %p1189 = pneg %p186
        $region58: #{tpu_custom_call.1} parent=39 // pred_check_branch
          %1191 = sbr.rel (%p1189) target = $region60
        $region59: #{tpu_custom_call.1} parent=39 // pred_region
          %s1192 = smul.u32 32, %s37
          %1194 = vsyncadd %s1175, 0
          %s1195 = smul.addr %s36, 32
          %s1196 = sadd.s32 %s1192, %s1195
          %s1197 = smul.addr %s1196, 4
          %s1198 = scalar_lea.hbm %s5, %s1197
          %s1199 = sshll.u32 %s1178, 4
          %s1200 = int_to_ptr.vmem [resolvable:$true] %s1199
          %s1201 = sshll.u32 %s1198, 4
          %s1202 = int_to_ptr.hbm [resolvable:$true] %s1201
          %1207 = dma.vmem_to_hbm [thread:$0]  %s1200, 2048, %s1202, %s1175, 64, 64, 4
        $region60: #{tpu_custom_call.1} parent=39 // pred_fallthru
          _
        // Predicated region
        $region61: #{tpu_custom_call.1} parent=39 // pred_check
          %p1208 = pneg %p214
        $region62: #{tpu_custom_call.1} parent=39 // pred_check_branch
          %1210 = sbr.rel (%p1208) target = $region64
        $region63: #{tpu_custom_call.1} parent=39 // pred_region
          %s1211 = smul.u32 32, %s37
          %1213 = vsyncadd %s1180, 0
          %s1214 = smul.addr %s36, 32
          %s1215 = sadd.s32 %s1211, %s1214
          %s1216 = smul.addr %s1215, 4
          %s1217 = scalar_lea.hbm %s6, %s1216
          %s1218 = sshll.u32 %s1183, 4
          %s1219 = int_to_ptr.vmem [resolvable:$true] %s1218
          %s1220 = sshll.u32 %s1217, 4
          %s1221 = int_to_ptr.hbm [resolvable:$true] %s1220
          %1226 = dma.vmem_to_hbm [thread:$0]  %s1219, 2048, %s1221, %s1180, 64, 64, 4
        $region64: #{tpu_custom_call.1} parent=39 // pred_fallthru
          _
        // Predicated region
        $region65: #{tpu_custom_call.1} parent=39 // pred_check
          %p1227 = pneg %p242
        $region66: #{tpu_custom_call.1} parent=39 // pred_check_branch
          %1229 = sbr.rel (%p1227) target = $region68
        $region67: #{tpu_custom_call.1} parent=39 // pred_region
          %s1230 = smul.u32 32, %s37
          %1232 = vsyncadd %s1185, 0
          %s1233 = smul.addr %s36, 32
          %s1234 = sadd.s32 %s1230, %s1233
          %s1235 = smul.addr %s1234, 4
          %s1236 = scalar_lea.hbm %s7, %s1235
          %s1237 = sshll.u32 %s1188, 4
          %s1238 = int_to_ptr.vmem [resolvable:$true] %s1237
          %s1239 = sshll.u32 %s1236, 4
          %s1240 = int_to_ptr.hbm [resolvable:$true] %s1239
          %1245 = dma.vmem_to_hbm [thread:$0]  %s1238, 2048, %s1240, %s1185, 64, 64, 4
        $region68: #{tpu_custom_call.1} parent=39 // pred_fallthru
          _
      $region40: #{tpu_custom_call.1} parent=5 // pred_fallthru
        _
      %p1246 = scmp.le.s32.totalorder 2, %s27
      // Predicated region
      $region69: #{tpu_custom_call.1} parent=5 // pred_check
        %p1247 = pneg %p1246
      $region70: #{tpu_custom_call.1} parent=5 // pred_check_branch
        %1249 = sbr.rel (%p1247) target = $region72
      $region71: #{tpu_custom_call.1} parent=5 // pred_region
        %s1250 = ssub.s32 %s27, 2
        // Predicated region
        $region73: #{tpu_custom_call.1} parent=71 // pred_check
          %p1251 = pneg %p192
        $region74: #{tpu_custom_call.1} parent=71 // pred_check_branch
          %1253 = sbr.rel (%p1251) target = $region76
        $region75: #{tpu_custom_call.1} parent=71 // pred_region
          %s1254 = sand.u32 %s177, 1
          %s1255 = scalar_lea.sflag [#allocation4], %s1254
          %s1256 = sand.u32 %s177, 1
          %s1257 = smul.addr %s1256, 128
          %s1258 = scalar_lea.vmem [#allocation10], %s1257
          %1260 = dma.done %s1255, 2048
        $region76: #{tpu_custom_call.1} parent=71 // pred_fallthru
          _
        // Predicated region
        $region77: #{tpu_custom_call.1} parent=71 // pred_check
          %p1261 = pneg %p220
        $region78: #{tpu_custom_call.1} parent=71 // pred_check_branch
          %1263 = sbr.rel (%p1261) target = $region80
        $region79: #{tpu_custom_call.1} parent=71 // pred_region
          %s1264 = sand.u32 %s33, 1
          %s1265 = scalar_lea.sflag [#allocation12], %s1264
          %s1266 = sand.u32 %s205, 1
          %s1267 = smul.addr %s1266, 128
          %s1268 = scalar_lea.vmem [#allocation11], %s1267
          %1270 = dma.done %s1265, 2048
        $region80: #{tpu_custom_call.1} parent=71 // pred_fallthru
          _
        // Predicated region
        $region81: #{tpu_custom_call.1} parent=71 // pred_check
          %p1271 = pneg %p248
        $region82: #{tpu_custom_call.1} parent=71 // pred_check_branch
          %1273 = sbr.rel (%p1271) target = $region84
        $region83: #{tpu_custom_call.1} parent=71 // pred_region
          %s1274 = sand.u32 %s33, 1
          %s1275 = scalar_lea.sflag [#allocation12], %s1274
          %s1276 = sand.u32 %s233, 1
          %s1277 = smul.addr %s1276, 128
          %s1278 = scalar_lea.vmem [#allocation13], %s1277
          %1280 = dma.done %s1275, 2048
        $region84: #{tpu_custom_call.1} parent=71 // pred_fallthru
          _
      $region72: #{tpu_custom_call.1} parent=5 // pred_fallthru
        _
    $region6: #{tpu_custom_call.1} parent=1 // loop_footer
      %s31 = sadd.s32 1, %s27
    $region7: #{tpu_custom_call.1} parent=1 // loop_footer_branch
      %26 = sbr.rel target = $region3
    $region8: #{tpu_custom_call.1} parent=1 // loop_exit
      _
    %1281 = vsyncpa [#allocation3], 1
    %s1282 = scalar_lea.sflag [#allocation3], 1
    %1283 = vsyncpa %s1282, 1
    %1284 = vsyncpa [#allocation6], 1
    %s1285 = scalar_lea.sflag [#allocation6], 1
    %1286 = vsyncpa %s1285, 1
    %1287 = vsyncpa [#allocation9], 1
    %1288 = vsyncpa [#allocation4], 1
    %s1289 = scalar_lea.sflag [#allocation4], 1
    %1290 = vsyncpa %s1289, 1
    %1291 = vsyncpa [#allocation12], 1
    %s1292 = scalar_lea.sflag [#allocation12], 1
    %1293 = vsyncpa %s1292, 1

</llo_original>
